<compile_context>
chip_gen: v7x
topology: tpu7x:2x2x1
jax: 0.10.0
libtpu: 0.0.40
codegen_flags: <defaults>
</compile_context>

<pallas_src>
import functools

import jax
import jax.numpy as jnp
from jax.experimental import pallas as pl
from jax.experimental.pallas import tpu as pltpu


# --------------------------------------------------------------------------- #
# Kernel                                                                      #
# --------------------------------------------------------------------------- #
def _rs_aug_kernel(ry_ref, cxt_ref, x_ref, out_ref, t_ref, *, c, h):
    """Separable bilinear resample for a block of B images (flattened C*H rows).

    ry_ref : (B, H, H)    row-interpolation matrices      (compute dtype)
    cxt_ref: (B, W, W)    transposed col-interp matrices  (compute dtype)
    x_ref  : (B, C*H, W)  input images (original, un-padded, flattened)
    out_ref: (B, C*H, W)  output images (flattened)
    t_ref  : (C*H, W)     VMEM scratch (compute dtype)
    """
    b = x_ref.shape[0]
    cdt = t_ref.dtype

    def body(i, carry):
        ry = ry_ref[i]                        # (H, H)
        cxt = cxt_ref[i]                      # (W, W)
        xs = x_ref[i].astype(cdt)             # (C*H, W): one slab load + one cast
        # Row pass: per-channel (H,H)@(H,W) MXU matmuls on static slices of the
        # flattened slab (no in-kernel reshapes -> no VMEM relayouts).
        # TODO(synk): a fused (H,H)@(H,C*W) row pass needs an (H, C*W) operand
        # layout; skipped since producing it would re-introduce a relayout.
        for ci in range(c):
            r = jnp.dot(ry, xs[ci * h:(ci + 1) * h, :],
                        preferred_element_type=jnp.float32)
            t_ref[ci * h:(ci + 1) * h, :] = r.astype(cdt)
        # Column pass fused over channels: one (C*H, W)@(W, W) matmul and one
        # (C*H, W) slab store per image.
        o = jnp.dot(t_ref[...], cxt, preferred_element_type=jnp.float32)
        out_ref[i] = o.astype(out_ref.dtype)
        return carry

    # fori_loop (not a static Python unroll) bounds live ranges / vreg pressure.
    jax.lax.fori_loop(0, b, body, None, unroll=2 if b > 1 else 1)


# --------------------------------------------------------------------------- #
# Interpolation-matrix construction (float32)                                 #
# --------------------------------------------------------------------------- #
def _interp_matrix_folded(coords, size_in, pad):
    """(n, size_out) padded-space coords -> (n, size_out, size_in) matrices.

    Folds the replicate pad into the matrix: bilinear neighbour indices live in
    the padded coordinate system [0, size_in + 2*pad); indices outside it get
    zero weight (grid_sample padding_mode='zeros' on the padded image), indices
    inside it are clamped into the ORIGINAL extent (replicate padding).
    All math in float32; caller casts the result.
    """
    size_pad = size_in + 2 * pad
    i0 = jnp.floor(coords)
    frac = coords - i0
    i0 = i0.astype(jnp.int32)
    i1 = i0 + 1
    w0 = 1.0 - frac
    w1 = frac
    valid0 = ((i0 >= 0) & (i0 < size_pad)).astype(coords.dtype)
    valid1 = ((i1 >= 0) & (i1 < size_pad)).astype(coords.dtype)
    c0 = jnp.clip(i0 - pad, 0, size_in - 1)
    c1 = jnp.clip(i1 - pad, 0, size_in - 1)
    return (jax.nn.one_hot(c0, size_in, dtype=coords.dtype) * (w0 * valid0)[..., None]
            + jax.nn.one_hot(c1, size_in, dtype=coords.dtype) * (w1 * valid1)[..., None])


# --------------------------------------------------------------------------- #
# VMEM budgeting / block picking (generation-aware)                           #
# --------------------------------------------------------------------------- #
def _round_up(v, m):
    return ((v + m - 1) // m) * m


def _vmem_bytes_per_step(block_n, c, h, w, in_bytes, out_bytes, cdt_bytes):
    """Approx VMEM footprint of one grid step: lane (128) / sublane (8) padded
    tiles, double-buffered pipelined operands, plus the scratch slab."""
    wl = _round_up(w, 128)
    hl = _round_up(h, 128)
    ch_s = _round_up(c * h, 8)
    x_blk = block_n * ch_s * wl * in_bytes
    o_blk = block_n * ch_s * wl * out_bytes
    ry_blk = block_n * _round_up(h, 8) * hl * cdt_bytes
    cx_blk = block_n * _round_up(w, 8) * wl * cdt_bytes
    scratch = ch_s * wl * cdt_bytes
    return 2 * (x_blk + o_blk + ry_blk + cx_blk) + scratch


def _vmem_budget_bytes():
    """~75% of per-core VMEM: 96 MiB on v5e/v6e (128 MiB), 48 MiB on v7x (64 MiB)."""
    try:
        cap = int(pltpu.get_tpu_info().vmem_capacity_bytes)
    except Exception:  # info unavailable (e.g. interpret mode) -> conservative
        cap = 64 * 1024 * 1024
    return (cap * 3) // 4


def _pick_block_n(n, c, h, w, in_bytes, out_bytes, cdt_bytes, budget,
                  max_block_n=32):
    """Largest divisor of n (<= max_block_n) fitting the VMEM budget while
    keeping >= 4 grid steps when possible (v7x megacore: >= 2 steps per TC)."""
    min_steps = min(4, n)
    best = 1
    for d in range(1, min(n, max_block_n) + 1):
        if n % d:
            continue
        if n // d < min_steps:
            continue
        if _vmem_bytes_per_step(d, c, h, w, in_bytes, out_bytes, cdt_bytes) <= budget:
            best = d
    return best


# --------------------------------------------------------------------------- #
# Wrapper                                                                     #
# --------------------------------------------------------------------------- #
@functools.partial(jax.jit, static_argnames=("pad", "compute_dtype", "block_n"))
def random_shifts_aug(x, key, *, pad, compute_dtype=jnp.bfloat16, block_n=None):
    n, c, h, w = x.shape
    assert h == w
    hp = h + 2 * pad
    wp = w + 2 * pad
    f32 = jnp.float32

    # --- coordinate / weight math strictly in float32 (mirrors PyTorch) ---
    eps = 1.0 / hp
    arange = jnp.linspace(-1.0 + eps, 1.0 - eps, hp, dtype=f32)[:h]      # (h,) == (w,)
    shift = jax.random.randint(key, (n, 2), 0, 2 * pad + 1).astype(f32)  # integer shifts
    shift = shift * (2.0 / hp)
    gx = arange[None, :] + shift[:, 0:1]          # (n, w)  x / width coordinate
    gy = arange[None, :] + shift[:, 1:2]          # (n, h)  y / height coordinate
    ix = ((gx + 1.0) * wp - 1.0) * 0.5            # un-normalize, align_corners=False
    iy = ((gy + 1.0) * hp - 1.0) * 0.5
    ry = _interp_matrix_folded(iy, h, pad).astype(compute_dtype)                    # (n, h, h)
    cxt = jnp.swapaxes(_interp_matrix_folded(ix, w, pad), 1, 2).astype(compute_dtype)  # (n, w, w)

    in_bytes = jnp.dtype(x.dtype).itemsize
    cdt_bytes = jnp.dtype(compute_dtype).itemsize
    budget = _vmem_budget_bytes()
    if block_n is None:
        block_n = _pick_block_n(n, c, h, w, in_bytes, in_bytes, cdt_bytes, budget)
    elif n % block_n != 0:
        raise ValueError(f"block_n={block_n} must divide batch size n={n}")
    grid = (n // block_n,)

    # Flatten (C, H) -> C*H at the wrapper (free, contiguous): one big DMA tile
    # per image, no in-kernel reshapes crossing (8,128) tile boundaries.
    x2 = x.reshape(n, c * h, w)

    cost = pl.CostEstimate(
        flops=int(2 * n * c * h * w * (h + w)),
        transcendentals=0,
        bytes_accessed=int(2 * n * c * h * w * in_bytes
                           + n * (h * h + w * w) * cdt_bytes))

    out2 = pl.pallas_call(
        functools.partial(_rs_aug_kernel, c=c, h=h),
        out_shape=jax.ShapeDtypeStruct((n, c * h, w), x.dtype),
        grid=grid,
        in_specs=[
            pl.BlockSpec((block_n, h, h), lambda g: (g, 0, 0)),
            pl.BlockSpec((block_n, w, w), lambda g: (g, 0, 0)),
            pl.BlockSpec((block_n, c * h, w), lambda g: (g, 0, 0)),
        ],
        out_specs=pl.BlockSpec((block_n, c * h, w), lambda g: (g, 0, 0)),
        scratch_shapes=[pltpu.VMEM((c * h, w), compute_dtype)],
        compiler_params=pltpu.CompilerParams(
            dimension_semantics=("parallel",),
            vmem_limit_bytes=int(budget)),
        cost_estimate=cost,
    )(ry, cxt, x2)
    return out2.reshape(n, c, h, w)


# ----------------------------- pure-JAX reference -----------------------------
def _interp_matrix_zeropad(coords, size_in):
    """Bilinear gather matrix with zero padding against [0, size_in)."""
    i0 = jnp.floor(coords)
    frac = coords - i0
    i0 = i0.astype(jnp.int32)
    i1 = i0 + 1
    w0 = 1.0 - frac
    w1 = frac
    v0 = ((i0 >= 0) & (i0 < size_in)).astype(coords.dtype)
    v1 = ((i1 >= 0) & (i1 < size_in)).astype(coords.dtype)
    c0 = jnp.clip(i0, 0, size_in - 1)
    c1 = jnp.clip(i1, 0, size_in - 1)
    return (jax.nn.one_hot(c0, size_in, dtype=coords.dtype) * (w0 * v0)[..., None]
            + jax.nn.one_hot(c1, size_in, dtype=coords.dtype) * (w1 * v1)[..., None])


def _reference(x, key, pad):
    """Replicate-pad + zero-padded bilinear grid_sample (original formulation), f32."""
    n, c, h, w = x.shape
    hp, wp = h + 2 * pad, w + 2 * pad
    xpad = jnp.pad(x, ((0, 0), (0, 0), (pad, pad), (pad, pad)), mode="edge").astype(jnp.float32)
    eps = 1.0 / hp
    arange = jnp.linspace(-1.0 + eps, 1.0 - eps, hp, dtype=jnp.float32)[:h]
    shift = jax.random.randint(key, (n, 2), 0, 2 * pad + 1).astype(jnp.float32) * (2.0 / hp)
    ix = ((arange[None, :] + shift[:, 0:1] + 1.0) * wp - 1.0) * 0.5
    iy = ((arange[None, :] + shift[:, 1:2] + 1.0) * hp - 1.0) * 0.5
    Ry = _interp_matrix_zeropad(iy, hp)   # (n, h, hp)
    Cx = _interp_matrix_zeropad(ix, wp)   # (n, w, wp)
    return jnp.einsum("nyh,nchw,nxw->ncyx", Ry, xpad, Cx).astype(x.dtype)


if __name__ == "__main__":
    pad = 4
    n, c, h, w = 2, 4, 16, 16
    root = jax.random.PRNGKey(0)
    kx, kshift = jax.random.split(root)
    x = jax.random.normal(kx, (n, c, h, w), dtype=jnp.float32)

    ref = _reference(x, kshift, pad)

    # Exact-path check: f32 MXU operands should match the reference to fp32 noise.
    out_f32 = jax.block_until_ready(
        random_shifts_aug(x, kshift, pad=pad, compute_dtype=jnp.float32))
    assert out_f32.shape == (n, c, h, w)
    err_f32 = float(jnp.max(jnp.abs(out_f32 - ref)))
    assert err_f32 < 1e-4, err_f32

    # Production path (bf16 MXU operands, f32 accumulation): looser tolerance.
    out_bf16 = jax.block_until_ready(random_shifts_aug(x, kshift, pad=pad))
    err_bf16 = float(jnp.max(jnp.abs(out_bf16 - ref)))
    assert err_bf16 < 6e-2, err_bf16

    print("KERNEL_OK")
</pallas_src>

<mosaic_0001>
module attributes {stable_mosaic.version = 11 : i64} {
  func.func @_rs_aug_kernel(%arg0: i32, %arg1: memref<1x16x16xf32, #tpu.memory_space<vmem>>, %arg2: memref<1x16x16xf32, #tpu.memory_space<vmem>>, %arg3: memref<1x64x16xf32, #tpu.memory_space<vmem>>, %arg4: memref<1x64x16xf32, #tpu.memory_space<vmem>>, %arg5: memref<64x16xf32, #tpu.memory_space<vmem>>) attributes {dimension_semantics = [#tpu.dimension_semantics<parallel>], iteration_bounds = array<i64: 2>, scalar_prefetch = 0 : i64, scratch_operands = 1 : i64, tpu.core_type = #tpu.core_type<tc>, window_params = [{transform_indices = @transform_0, window_bounds = array<i64: 1, 16, 16>}, {transform_indices = @transform_1, window_bounds = array<i64: 1, 16, 16>}, {transform_indices = @transform_2, window_bounds = array<i64: 1, 64, 16>}, {transform_indices = @transform_3, window_bounds = array<i64: 1, 64, 16>}]} {
    %c0_i32 = arith.constant 0 : i32
    %0 = arith.index_cast %c0_i32 : i32 to index
    %c0 = arith.constant 0 : index
    %c0_0 = arith.constant 0 : index
    %1 = vector.load %arg1[%0, %c0, %c0_0] : memref<1x16x16xf32, #tpu.memory_space<vmem>>, vector<1x16x16xf32>
    %2 = vector.shape_cast %1 : vector<1x16x16xf32> to vector<16x16xf32>
    %3 = arith.index_cast %c0_i32 : i32 to index
    %c0_1 = arith.constant 0 : index
    %c0_2 = arith.constant 0 : index
    %4 = vector.load %arg2[%3, %c0_1, %c0_2] : memref<1x16x16xf32, #tpu.memory_space<vmem>>, vector<1x16x16xf32>
    %5 = vector.shape_cast %4 : vector<1x16x16xf32> to vector<16x16xf32>
    %6 = arith.index_cast %c0_i32 : i32 to index
    %c0_3 = arith.constant 0 : index
    %c0_4 = arith.constant 0 : index
    %7 = vector.load %arg3[%6, %c0_3, %c0_4] : memref<1x64x16xf32, #tpu.memory_space<vmem>>, vector<1x64x16xf32>
    %8 = vector.shape_cast %7 : vector<1x64x16xf32> to vector<64x16xf32>
    %9 = vector.extract_strided_slice %8 {offsets = [0, 0], sizes = [16, 16], strides = [1, 1]} : vector<64x16xf32> to vector<16x16xf32>
    %cst = arith.constant dense<0.000000e+00> : vector<16x16xf32>
    %10 = tpu.matmul %2, %9, %cst {dimension_numbers = #tpu.dot_dimension_numbers<[1], [0], [0], [1], [0, 0, 1, 1], [], []>} : vector<16x16xf32>, vector<16x16xf32>, vector<16x16xf32> -> vector<16x16xf32>
    %c0_5 = arith.constant 0 : index
    %c0_6 = arith.constant 0 : index
    %11 = vector.load %arg5[%c0_5, %c0_6] : memref<64x16xf32, #tpu.memory_space<vmem>>, vector<16x16xf32>
    tpu.vector_store %arg5[%c0_5, %c0_6], %10 {strides = array<i32>} : memref<64x16xf32, #tpu.memory_space<vmem>>, vector<16x16xf32>,
    %12 = vector.extract_strided_slice %8 {offsets = [16, 0], sizes = [16, 16], strides = [1, 1]} : vector<64x16xf32> to vector<16x16xf32>
    %cst_7 = arith.constant dense<0.000000e+00> : vector<16x16xf32>
    %13 = tpu.matmul %2, %12, %cst_7 {dimension_numbers = #tpu.dot_dimension_numbers<[1], [0], [0], [1], [0, 0, 1, 1], [], []>} : vector<16x16xf32>, vector<16x16xf32>, vector<16x16xf32> -> vector<16x16xf32>
    %c16 = arith.constant 16 : index
    %c0_8 = arith.constant 0 : index
    %14 = vector.load %arg5[%c16, %c0_8] : memref<64x16xf32, #tpu.memory_space<vmem>>, vector<16x16xf32>
    tpu.vector_store %arg5[%c16, %c0_8], %13 {strides = array<i32>} : memref<64x16xf32, #tpu.memory_space<vmem>>, vector<16x16xf32>,
    %15 = vector.extract_strided_slice %8 {offsets = [32, 0], sizes = [16, 16], strides = [1, 1]} : vector<64x16xf32> to vector<16x16xf32>
    %cst_9 = arith.constant dense<0.000000e+00> : vector<16x16xf32>
    %16 = tpu.matmul %2, %15, %cst_9 {dimension_numbers = #tpu.dot_dimension_numbers<[1], [0], [0], [1], [0, 0, 1, 1], [], []>} : vector<16x16xf32>, vector<16x16xf32>, vector<16x16xf32> -> vector<16x16xf32>
    %c32 = arith.constant 32 : index
    %c0_10 = arith.constant 0 : index
    %17 = vector.load %arg5[%c32, %c0_10] : memref<64x16xf32, #tpu.memory_space<vmem>>, vector<16x16xf32>
    tpu.vector_store %arg5[%c32, %c0_10], %16 {strides = array<i32>} : memref<64x16xf32, #tpu.memory_space<vmem>>, vector<16x16xf32>,
    %18 = vector.extract_strided_slice %8 {offsets = [48, 0], sizes = [16, 16], strides = [1, 1]} : vector<64x16xf32> to vector<16x16xf32>
    %cst_11 = arith.constant dense<0.000000e+00> : vector<16x16xf32>
    %19 = tpu.matmul %2, %18, %cst_11 {dimension_numbers = #tpu.dot_dimension_numbers<[1], [0], [0], [1], [0, 0, 1, 1], [], []>} : vector<16x16xf32>, vector<16x16xf32>, vector<16x16xf32> -> vector<16x16xf32>
    %c48 = arith.constant 48 : index
    %c0_12 = arith.constant 0 : index
    %20 = vector.load %arg5[%c48, %c0_12] : memref<64x16xf32, #tpu.memory_space<vmem>>, vector<16x16xf32>
    tpu.vector_store %arg5[%c48, %c0_12], %19 {strides = array<i32>} : memref<64x16xf32, #tpu.memory_space<vmem>>, vector<16x16xf32>,
    %c0_13 = arith.constant 0 : index
    %c0_14 = arith.constant 0 : index
    %21 = vector.load %arg5[%c0_13, %c0_14] : memref<64x16xf32, #tpu.memory_space<vmem>>, vector<64x16xf32>
    %cst_15 = arith.constant dense<0.000000e+00> : vector<64x16xf32>
    %22 = tpu.matmul %21, %5, %cst_15 {dimension_numbers = #tpu.dot_dimension_numbers<[1], [0], [0], [1], [0, 0, 1, 1], [], []>} : vector<64x16xf32>, vector<16x16xf32>, vector<64x16xf32> -> vector<64x16xf32>
    %23 = arith.index_cast %c0_i32 : i32 to index
    %c0_16 = arith.constant 0 : index
    %c0_17 = arith.constant 0 : index
    %24 = vector.load %arg4[%23, %c0_16, %c0_17] : memref<1x64x16xf32, #tpu.memory_space<vmem>>, vector<1x64x16xf32>
    %25 = vector.shape_cast %24 : vector<1x64x16xf32> to vector<64x16xf32>
    %26 = vector.shape_cast %22 : vector<64x16xf32> to vector<1x64x16xf32>
    tpu.vector_store %arg4[%23, %c0_16, %c0_17], %26 {strides = array<i32>} : memref<1x64x16xf32, #tpu.memory_space<vmem>>, vector<1x64x16xf32>,
    %c1_i32 = arith.constant 1 : i32
    return
  }
  func.func @transform_0(%arg0: i32) -> (i32, i32, i32) {
    %c0_i32 = arith.constant 0 : i32
    %c0_i32_0 = arith.constant 0 : i32
    %c0_i32_1 = arith.constant 0 : i32
    return %arg0, %c0_i32, %c0_i32_0 : i32, i32, i32
  }
  func.func @transform_1(%arg0: i32) -> (i32, i32, i32) {
    %c0_i32 = arith.constant 0 : i32
    %c0_i32_0 = arith.constant 0 : i32
    %c0_i32_1 = arith.constant 0 : i32
    return %arg0, %c0_i32, %c0_i32_0 : i32, i32, i32
  }
  func.func @transform_2(%arg0: i32) -> (i32, i32, i32) {
    %c0_i32 = arith.constant 0 : i32
    %c0_i32_0 = arith.constant 0 : i32
    %c0_i32_1 = arith.constant 0 : i32
    return %arg0, %c0_i32, %c0_i32_0 : i32, i32, i32
  }
  func.func @transform_3(%arg0: i32) -> (i32, i32, i32) {
    %c0_i32 = arith.constant 0 : i32
    %c0_i32_0 = arith.constant 0 : i32
    %c0_i32_1 = arith.constant 0 : i32
    return %arg0, %c0_i32, %c0_i32_0 : i32, i32, i32
  }
}

</mosaic_0001>

<llo_original>
// kernel: random_shifts_aug.1
$region0: #{random_shifts_aug.1}
  #allocation0 [shape = 'u32[]', space=smem, size = 0x4, offset = 0x4, fixed_abs, tag = 'smem constant byte address 0x4 - core index']
  #allocation1 [shape = 'u32[144,128]{1,0:T(1,128)}', space=vmem, size = 0x12000, scoped, tag = 'internal scratch']
  #allocation2 [shape = 'f32[64,16]{1,0:T(8,128)}', space=vmem, size = 0x8000, scoped, tag = 'scratch operand']
  %s0 = inlined_call_operand.vmem [shape: f32[2,16,16], index: 0, kind: input, shape index: {}]
  %s1 = inlined_call_operand.vmem [shape: f32[2,16,16], index: 1, kind: input, shape index: {}]
  %s2 = inlined_call_operand.vmem [shape: f32[2,64,16], index: 2, kind: input, shape index: {}]
  %s3 = inlined_call_operand.hbm [shape: f32[2,64,16], index: 3, kind: output, shape index: {}]
  %s4 = sld [smem:[#allocation0]]
  $region45: #{random_shifts_aug.1} parent=0
    _
  %s6 = ssub.s32 1, %s4
  %s7 = scalar_select 0, %s6, %s4
  $region1: #{random_shifts_aug.1} parent=0
    #allocation3 [shape = 'u8[65536]{0}', space=vmem, size = 0x10000, scoped, tag = 'output window, operand 0']
    #allocation4 [shape = 's32[2]{0}', space=sflag, size = 0x8, scoped, tag = 'scoped memory for random_shifts_aug.1']
    %8 = vsyncpa [#allocation4], 0
    %s9 = scalar_lea.sflag [#allocation4], 1
    %10 = vsyncpa %s9, 0
    loop: start=0, step=1, limit=4
    $region2: #{random_shifts_aug.1} parent=1 // loop_pre_header
      _
    $region3: #{random_shifts_aug.1} parent=1 // loop_header
      %s12 = sphi 0, %s16
      %p13 = scmp.ge.s32.totalorder %s12, 4
      %s22 = sphi 0, %s24
      %s25 = sphi 0, %s22
      %s26 = sphi 0, %s25
      %s42 = sphi 0, %s26
      %s48 = sphi 0, %s50
      %s51 = sphi 0, %s48
      %s52 = sphi 0, %s51
      %s68 = sphi 0, %s52
      %s74 = sphi 0, %s76
      %s77 = sphi 0, %s74
      %s78 = sphi 0, %s77
      %s94 = sphi 0, %s78
      %s100 = sphi 0, %s102
      %s103 = sphi 0, %s100
      %s104 = sphi 0, %s103
      %s120 = sphi 0, %s104
    $region4: #{random_shifts_aug.1} parent=1 // loop_header_branch
      %15 = sbr.rel (%p13) target = $region8
    $region5: #{random_shifts_aug.1} parent=1 // loop_body
      %s17 = ssub.s32 %s12, 1
      %s18 = ssub.s32 %s12, 2
      %s19 = sadd.s32 %s12, 1
      %s20 = ssub.s32 %s12, %s19
      %p21 = scmp.eq.s32.totalorder %s20, 0
      %s23 = sadd.s32 %s22, 1
      %s24 = scalar_select %p21, %s22, %s23
      %p27 = pneg %p21
      %p28 = scmp.eq.s32.totalorder %s12, 1
      %p29 = por %p27, %p28
      %p30 = scmp.ne.s32.totalorder %s22, %s25
      %p31 = scmp.eq.s32.totalorder %s12, 0
      %p32 = por %p30, %p31
      %p33 = scmp.ne.s32.totalorder %s22, %s25
      %p34 = scmp.eq.s32.totalorder %s17, 1
      %p35 = por %p33, %p34
      %p36 = scmp.ne.s32.totalorder %s25, %s26
      %p37 = scmp.eq.s32.totalorder %s17, 0
      %p38 = por %p36, %p37
      %p39 = scmp.ne.s32.totalorder %s25, %s26
      %p40 = scmp.eq.s32.totalorder %s18, 1
      %p41 = por %p39, %p40
      %p43 = scmp.ne.s32.totalorder %s26, %s42
      %p44 = scmp.eq.s32.totalorder %s18, 0
      %p45 = por %p43, %p44
      %s46 = ssub.s32 %s12, %s19
      %p47 = scmp.eq.s32.totalorder %s46, 0
      %s49 = sadd.s32 %s48, 1
      %s50 = scalar_select %p47, %s48, %s49
      %p53 = pneg %p47
      %p54 = scmp.eq.s32.totalorder %s12, 1
      %p55 = por %p53, %p54
      %p56 = scmp.ne.s32.totalorder %s48, %s51
      %p57 = scmp.eq.s32.totalorder %s12, 0
      %p58 = por %p56, %p57
      %p59 = scmp.ne.s32.totalorder %s48, %s51
      %p60 = scmp.eq.s32.totalorder %s17, 1
      %p61 = por %p59, %p60
      %p62 = scmp.ne.s32.totalorder %s51, %s52
      %p63 = scmp.eq.s32.totalorder %s17, 0
      %p64 = por %p62, %p63
      %p65 = scmp.ne.s32.totalorder %s51, %s52
      %p66 = scmp.eq.s32.totalorder %s18, 1
      %p67 = por %p65, %p66
      %p69 = scmp.ne.s32.totalorder %s52, %s68
      %p70 = scmp.eq.s32.totalorder %s18, 0
      %p71 = por %p69, %p70
      %s72 = ssub.s32 %s12, %s19
      %p73 = scmp.eq.s32.totalorder %s72, 0
      %s75 = sadd.s32 %s74, 1
      %s76 = scalar_select %p73, %s74, %s75
      %p79 = pneg %p73
      %p80 = scmp.eq.s32.totalorder %s12, 1
      %p81 = por %p79, %p80
      %p82 = scmp.ne.s32.totalorder %s74, %s77
      %p83 = scmp.eq.s32.totalorder %s12, 0
      %p84 = por %p82, %p83
      %p85 = scmp.ne.s32.totalorder %s74, %s77
      %p86 = scmp.eq.s32.totalorder %s17, 1
      %p87 = por %p85, %p86
      %p88 = scmp.ne.s32.totalorder %s77, %s78
      %p89 = scmp.eq.s32.totalorder %s17, 0
      %p90 = por %p88, %p89
      %p91 = scmp.ne.s32.totalorder %s77, %s78
      %p92 = scmp.eq.s32.totalorder %s18, 1
      %p93 = por %p91, %p92
      %p95 = scmp.ne.s32.totalorder %s78, %s94
      %p96 = scmp.eq.s32.totalorder %s18, 0
      %p97 = por %p95, %p96
      %s98 = ssub.s32 %s12, %s19
      %p99 = scmp.eq.s32.totalorder %s98, 0
      %s101 = sadd.s32 %s100, 1
      %s102 = scalar_select %p99, %s100, %s101
      %p105 = pneg %p99
      %p106 = scmp.eq.s32.totalorder %s12, 1
      %p107 = por %p105, %p106
      %p108 = scmp.ne.s32.totalorder %s100, %s103
      %p109 = scmp.eq.s32.totalorder %s12, 0
      %p110 = por %p108, %p109
      %p111 = scmp.ne.s32.totalorder %s100, %s103
      %p112 = scmp.eq.s32.totalorder %s17, 1
      %p113 = por %p111, %p112
      %p114 = scmp.ne.s32.totalorder %s103, %s104
      %p115 = scmp.eq.s32.totalorder %s17, 0
      %p116 = por %p114, %p115
      %p117 = scmp.ne.s32.totalorder %s103, %s104
      %p118 = scmp.eq.s32.totalorder %s18, 1
      %p119 = por %p117, %p118
      %p121 = scmp.ne.s32.totalorder %s104, %s120
      %p122 = scmp.eq.s32.totalorder %s18, 0
      %p123 = por %p121, %p122
      %p124 = scmp.le.s32.totalorder 1, %s12
      %p125 = scmp.lt.s32.totalorder %s12, 3
      %p126 = pnand %p124, %p125
      %p127 = pneg %p126
      // Predicated region
      $region9: #{random_shifts_aug.1} parent=5 // pred_check
        _
      $region10: #{random_shifts_aug.1} parent=5 // pred_check_branch
        %129 = sbr.rel (%p126) target = $region12
      $region11: #{random_shifts_aug.1} parent=5 // pred_region
        %s130 = ssub.s32 %s12, 1
      $region12: #{random_shifts_aug.1} parent=5 // pred_fallthru
        _
      %p131 = scmp.lt.s32.totalorder %s12, 2
      // Predicated region
      $region13: #{random_shifts_aug.1} parent=5 // pred_check
        %p132 = pneg %p131
      $region14: #{random_shifts_aug.1} parent=5 // pred_check_branch
        %134 = sbr.rel (%p132) target = $region16
      $region15: #{random_shifts_aug.1} parent=5 // pred_region
        // Predicated region
        $region17: #{random_shifts_aug.1} parent=15 // pred_check
          %p135 = pneg %p32
        $region18: #{random_shifts_aug.1} parent=15 // pred_check_branch
          %137 = sbr.rel (%p135) target = $region20
        $region19: #{random_shifts_aug.1} parent=15 // pred_region
          %p138 = scmp.lt.s32.totalorder %s12, 1
          %s139 = scalar_select %p138, %s12, 1
          %s140 = smul.addr %s139, 2
          %s141 = smul.addr %s140, 8
          %s142 = scalar_lea.vmem %s0, %s141
        $region20: #{random_shifts_aug.1} parent=15 // pred_fallthru
          _
        // Predicated region
        $region21: #{random_shifts_aug.1} parent=15 // pred_check
          %p143 = pneg %p58
        $region22: #{random_shifts_aug.1} parent=15 // pred_check_branch
          %145 = sbr.rel (%p143) target = $region24
        $region23: #{random_shifts_aug.1} parent=15 // pred_region
          %p146 = scmp.lt.s32.totalorder %s12, 1
          %s147 = scalar_select %p146, %s12, 1
          %s148 = smul.addr %s147, 2
          %s149 = smul.addr %s148, 8
          %s150 = scalar_lea.vmem %s1, %s149
        $region24: #{random_shifts_aug.1} parent=15 // pred_fallthru
          _
        // Predicated region
        $region25: #{random_shifts_aug.1} parent=15 // pred_check
          %p151 = pneg %p84
        $region26: #{random_shifts_aug.1} parent=15 // pred_check_branch
          %153 = sbr.rel (%p151) target = $region28
        $region27: #{random_shifts_aug.1} parent=15 // pred_region
          %p154 = scmp.lt.s32.totalorder %s12, 1
          %s155 = scalar_select %p154, %s12, 1
          %s156 = smul.addr %s155, 8
          %s157 = smul.addr %s156, 8
          %s158 = scalar_lea.vmem %s2, %s157
        $region28: #{random_shifts_aug.1} parent=15 // pred_fallthru
          _
      $region16: #{random_shifts_aug.1} parent=5 // pred_fallthru
        _
      %p159 = scmp.le.s32.totalorder 1, %s12
      %p160 = scmp.lt.s32.totalorder %s12, 3
      %p161 = pnand %p159, %p160
      %p162 = pneg %p161
      // Predicated region
      $region29: #{random_shifts_aug.1} parent=5 // pred_check
        _
      $region30: #{random_shifts_aug.1} parent=5 // pred_check_branch
        %164 = sbr.rel (%p161) target = $region32
      $region31: #{random_shifts_aug.1} parent=5 // pred_region
        %s165 = ssub.s32 %s12, 1
        %p166 = scmp.lt.s32.totalorder %s17, 1
        %s167 = scalar_select %p166, %s17, 1
        %s168 = smul.addr %s167, 2
        %s169 = smul.addr %s168, 8
        %s170 = scalar_lea.vmem %s0, %s169
        %p171 = pneg %p38
        %p172 = pneg %p35
        %p173 = scmp.lt.s32.totalorder %s17, 1
        %s174 = scalar_select %p173, %s17, 1
        %s175 = smul.addr %s174, 2
        %s176 = smul.addr %s175, 8
        %s177 = scalar_lea.vmem %s1, %s176
        %p178 = pneg %p64
        %p179 = pneg %p61
        %p180 = scmp.lt.s32.totalorder %s17, 1
        %s181 = scalar_select %p180, %s17, 1
        %s182 = smul.addr %s181, 8
        %s183 = smul.addr %s182, 8
        %s184 = scalar_lea.vmem %s2, %s183
        %p185 = pneg %p90
        %p186 = pneg %p87
        %p187 = pneg %p116
        %p188 = pneg %p113
        %s189 = sand.u32 %s103, 1
        %s190 = scalar_lea.sflag [#allocation4], %s189
        %s191 = sand.u32 %s103, 1
        %s192 = smul.addr %s191, 64
        %s193 = scalar_lea.vmem [#allocation3], %s192
        %p194 = scmp.lt.s32.totalorder %s17, 1
        %s195 = scalar_select %p194, %s17, 1
        %s196 = smul.addr %s195, 2
        %s197 = smul.addr %s196, 8
        %s198 = scalar_lea.vmem %s0, %s197
        %p199 = scmp.lt.s32.totalorder %s17, 1
        %s200 = scalar_select %p199, %s17, 1
        %s201 = smul.addr %s200, 2
        %s202 = smul.addr %s201, 8
        %s203 = scalar_lea.vmem %s1, %s202
        %p204 = scmp.lt.s32.totalorder %s17, 1
        %s205 = scalar_select %p204, %s17, 1
        %s206 = smul.addr %s205, 8
        %s207 = smul.addr %s206, 8
        %s208 = scalar_lea.vmem %s2, %s207
        %v209 = vld [vmem:[%s198] sm:$0xff]
        %v210 = vld [vmem:[%s198 + $0x8] sm:$0xff]
        %v211 = vld [vmem:[%s203] sm:$0xff]
        %v212 = vld [vmem:[%s203 + $0x8] sm:$0xff]
        %v213 = vld [vmem:[%s208] sm:$0xff]
        %v214 = vld [vmem:[%s208 + $0x8] sm:$0xff]
        %v215 = vld [vmem:[%s208 + $0x10] sm:$0xff]
        %v216 = vld [vmem:[%s208 + $0x18] sm:$0xff]
        %v217 = vld [vmem:[%s208 + $0x20] sm:$0xff]
        %v218 = vld [vmem:[%s208 + $0x28] sm:$0xff]
        %v219 = vld [vmem:[%s208 + $0x30] sm:$0xff]
        %v220 = vld [vmem:[%s208 + $0x38] sm:$0xff]
        %vm221 = vcmask 130048
        %v223 = vsel %vm221, %v209, 0
        %v226 = vsel %vm221, %v210, 0
        %228 = vmatprep.subr.mxu0 0.0
        %229 = vmatpush1.msra.mxu0 %v213
        %230 = vmatprep.subr.mxu0 0.0
        %231 = vmatpush1.msra.mxu0 %v214
        %232 = vmatprep.subr.mxu0 0.0
        %233 = vmatpush1.msra.mxu0 0.0
        %234 = vmatprep.subr.mxu0 0.0
        %235 = vmatpush1.msra.mxu0 0.0
        %236 = vmatprep.subr.mxu0 0.0
        %237 = vmatpush1.msra.mxu0 0.0
        %238 = vmatprep.subr.mxu0 0.0
        %239 = vmatpush1.msra.mxu0 0.0
        %240 = vmatprep.subr.mxu0 0.0
        %241 = vmatpush1.msra.mxu0 0.0
        %242 = vmatprep.subr.mxu0 0.0
        %243 = vmatpush1.msra.mxu0 0.0
        %244 = vmatprep.subr.mxu0 0.0
        %245 = vmatpush1.msra.mxu0 0.0
        %246 = vmatprep.subr.mxu0 0.0
        %247 = vmatpush1.msra.mxu0 0.0
        %248 = vmatprep.subr.mxu0 0.0
        %249 = vmatpush1.msra.mxu0 0.0
        %250 = vmatprep.subr.mxu0 0.0
        %251 = vmatpush1.msra.mxu0 0.0
        %252 = vmatprep.subr.mxu0 0.0
        %253 = vmatpush1.msra.mxu0 0.0
        %254 = vmatprep.subr.mxu0 0.0
        %255 = vmatpush1.msra.mxu0 0.0
        %256 = vmatprep.subr.mxu0 0.0
        %257 = vmatpush1.msra.mxu0 0.0
        %258 = vmatprep.subr.mxu0 0.0
        %259 = vmatpush1.msra.mxu0 0.0
        %260 = vmatprep.subr.mxu0 0.0
        %261 = vmatpush1.msra.mxu0 0.0
        %262 = vmatprep.subr.mxu0 0.0
        %263 = vmatpush1.msra.mxu0 0.0
        %264 = vmatprep.subr.mxu0 0.0
        %265 = vmatpush1.msra.mxu0 0.0
        %266 = vmatprep.subr.mxu0 0.0
        %267 = vmatpush1.msra.mxu0 0.0
        %268 = vmatprep.subr.mxu0 0.0
        %269 = vmatpush1.msra.mxu0 0.0
        %270 = vmatprep.subr.mxu0 0.0
        %271 = vmatpush1.msra.mxu0 0.0
        %272 = vmatprep.subr.mxu0 0.0
        %273 = vmatpush1.msra.mxu0 0.0
        %274 = vmatprep.subr.mxu0 0.0
        %275 = vmatpush1.msra.mxu0 0.0
        %276 = vmatprep.subr.mxu0 0.0
        %277 = vmatpush1.msra.mxu0 0.0
        %278 = vmatprep.subr.mxu0 0.0
        %279 = vmatpush1.msra.mxu0 0.0
        %280 = vmatprep.subr.mxu0 0.0
        %281 = vmatpush1.msra.mxu0 0.0
        %282 = vmatprep.subr.mxu0 0.0
        %283 = vmatpush1.msra.mxu0 0.0
        %284 = vmatprep.subr.mxu0 0.0
        %285 = vmatpush1.msra.mxu0 0.0
        %286 = vmatprep.subr.mxu0 0.0
        %287 = vmatpush1.msra.mxu0 0.0
        %288 = vmatprep.subr.mxu0 0.0
        %289 = vmatpush1.msra.mxu0 0.0
        %290 = vmatprep.subr.mxu0 0.0
        %291 = vmatpush1.msra.mxu0 0.0
        %292 = vmatprep.mubr.f32.mxu0 0.0
        %293 = vmatmul.mubr.f32.gmra.mrb[0].mxu0 %v223
        %v294 = vpop.f32.mrb[0].mxu0
        %v295 = vadd.f32 0.0, %v294
        %v296 = vpop.f32.mrb[0].mxu0
        %297 = vmatprep.mubr.f32.mxu0 0.0
        %298 = vmatmul.mubr.f32.gmra.mrb[0].mxu0 %v226
        %v299 = vpop.f32.mrb[0].mxu0
        %v300 = vadd.f32 0.0, %v299
        %v301 = vpop.f32.mrb[0].mxu0
        %302 = vdwg.mxu0
        %303 = vst.msk [vmem:[#allocation2] sm:$0xff] %vm221, %v295
        %304 = vst.msk [vmem:[#allocation2 + $0x8] sm:$0xff] %vm221, %v300
        %305 = vmatprep.subr.mxu0 0.0
        %306 = vmatpush1.msra.mxu0 %v215
        %307 = vmatprep.subr.mxu0 0.0
        %308 = vmatpush1.msra.mxu0 %v216
        %309 = vmatprep.subr.mxu0 0.0
        %310 = vmatpush1.msra.mxu0 0.0
        %311 = vmatprep.subr.mxu0 0.0
        %312 = vmatpush1.msra.mxu0 0.0
        %313 = vmatprep.subr.mxu0 0.0
        %314 = vmatpush1.msra.mxu0 0.0
        %315 = vmatprep.subr.mxu0 0.0
        %316 = vmatpush1.msra.mxu0 0.0
        %317 = vmatprep.subr.mxu0 0.0
        %318 = vmatpush1.msra.mxu0 0.0
        %319 = vmatprep.subr.mxu0 0.0
        %320 = vmatpush1.msra.mxu0 0.0
        %321 = vmatprep.subr.mxu0 0.0
        %322 = vmatpush1.msra.mxu0 0.0
        %323 = vmatprep.subr.mxu0 0.0
        %324 = vmatpush1.msra.mxu0 0.0
        %325 = vmatprep.subr.mxu0 0.0
        %326 = vmatpush1.msra.mxu0 0.0
        %327 = vmatprep.subr.mxu0 0.0
        %328 = vmatpush1.msra.mxu0 0.0
        %329 = vmatprep.subr.mxu0 0.0
        %330 = vmatpush1.msra.mxu0 0.0
        %331 = vmatprep.subr.mxu0 0.0
        %332 = vmatpush1.msra.mxu0 0.0
        %333 = vmatprep.subr.mxu0 0.0
        %334 = vmatpush1.msra.mxu0 0.0
        %335 = vmatprep.subr.mxu0 0.0
        %336 = vmatpush1.msra.mxu0 0.0
        %337 = vmatprep.subr.mxu0 0.0
        %338 = vmatpush1.msra.mxu0 0.0
        %339 = vmatprep.subr.mxu0 0.0
        %340 = vmatpush1.msra.mxu0 0.0
        %341 = vmatprep.subr.mxu0 0.0
        %342 = vmatpush1.msra.mxu0 0.0
        %343 = vmatprep.subr.mxu0 0.0
        %344 = vmatpush1.msra.mxu0 0.0
        %345 = vmatprep.subr.mxu0 0.0
        %346 = vmatpush1.msra.mxu0 0.0
        %347 = vmatprep.subr.mxu0 0.0
        %348 = vmatpush1.msra.mxu0 0.0
        %349 = vmatprep.subr.mxu0 0.0
        %350 = vmatpush1.msra.mxu0 0.0
        %351 = vmatprep.subr.mxu0 0.0
        %352 = vmatpush1.msra.mxu0 0.0
        %353 = vmatprep.subr.mxu0 0.0
        %354 = vmatpush1.msra.mxu0 0.0
        %355 = vmatprep.subr.mxu0 0.0
        %356 = vmatpush1.msra.mxu0 0.0
        %357 = vmatprep.subr.mxu0 0.0
        %358 = vmatpush1.msra.mxu0 0.0
        %359 = vmatprep.subr.mxu0 0.0
        %360 = vmatpush1.msra.mxu0 0.0
        %361 = vmatprep.subr.mxu0 0.0
        %362 = vmatpush1.msra.mxu0 0.0
        %363 = vmatprep.subr.mxu0 0.0
        %364 = vmatpush1.msra.mxu0 0.0
        %365 = vmatprep.subr.mxu0 0.0
        %366 = vmatpush1.msra.mxu0 0.0
        %367 = vmatprep.subr.mxu0 0.0
        %368 = vmatpush1.msra.mxu0 0.0
        %369 = vmatprep.mubr.f32.mxu0 0.0
        %370 = vmatmul.mubr.f32.gmra.mrb[0].mxu0 %v223
        %v371 = vpop.f32.mrb[0].mxu0
        %v372 = vadd.f32 0.0, %v371
        %v373 = vpop.f32.mrb[0].mxu0
        %374 = vmatprep.mubr.f32.mxu0 0.0
        %375 = vmatmul.mubr.f32.gmra.mrb[0].mxu0 %v226
        %v376 = vpop.f32.mrb[0].mxu0
        %v377 = vadd.f32 0.0, %v376
        %v378 = vpop.f32.mrb[0].mxu0
        %379 = vdwg.mxu0
        %380 = vst.msk [vmem:[#allocation2 + $0x10] sm:$0xff] %vm221, %v372
        %381 = vst.msk [vmem:[#allocation2 + $0x18] sm:$0xff] %vm221, %v377
        %382 = vmatprep.subr.mxu0 0.0
        %383 = vmatpush1.msra.mxu0 %v217
        %384 = vmatprep.subr.mxu0 0.0
        %385 = vmatpush1.msra.mxu0 %v218
        %386 = vmatprep.subr.mxu0 0.0
        %387 = vmatpush1.msra.mxu0 0.0
        %388 = vmatprep.subr.mxu0 0.0
        %389 = vmatpush1.msra.mxu0 0.0
        %390 = vmatprep.subr.mxu0 0.0
        %391 = vmatpush1.msra.mxu0 0.0
        %392 = vmatprep.subr.mxu0 0.0
        %393 = vmatpush1.msra.mxu0 0.0
        %394 = vmatprep.subr.mxu0 0.0
        %395 = vmatpush1.msra.mxu0 0.0
        %396 = vmatprep.subr.mxu0 0.0
        %397 = vmatpush1.msra.mxu0 0.0
        %398 = vmatprep.subr.mxu0 0.0
        %399 = vmatpush1.msra.mxu0 0.0
        %400 = vmatprep.subr.mxu0 0.0
        %401 = vmatpush1.msra.mxu0 0.0
        %402 = vmatprep.subr.mxu0 0.0
        %403 = vmatpush1.msra.mxu0 0.0
        %404 = vmatprep.subr.mxu0 0.0
        %405 = vmatpush1.msra.mxu0 0.0
        %406 = vmatprep.subr.mxu0 0.0
        %407 = vmatpush1.msra.mxu0 0.0
        %408 = vmatprep.subr.mxu0 0.0
        %409 = vmatpush1.msra.mxu0 0.0
        %410 = vmatprep.subr.mxu0 0.0
        %411 = vmatpush1.msra.mxu0 0.0
        %412 = vmatprep.subr.mxu0 0.0
        %413 = vmatpush1.msra.mxu0 0.0
        %414 = vmatprep.subr.mxu0 0.0
        %415 = vmatpush1.msra.mxu0 0.0
        %416 = vmatprep.subr.mxu0 0.0
        %417 = vmatpush1.msra.mxu0 0.0
        %418 = vmatprep.subr.mxu0 0.0
        %419 = vmatpush1.msra.mxu0 0.0
        %420 = vmatprep.subr.mxu0 0.0
        %421 = vmatpush1.msra.mxu0 0.0
        %422 = vmatprep.subr.mxu0 0.0
        %423 = vmatpush1.msra.mxu0 0.0
        %424 = vmatprep.subr.mxu0 0.0
        %425 = vmatpush1.msra.mxu0 0.0
        %426 = vmatprep.subr.mxu0 0.0
        %427 = vmatpush1.msra.mxu0 0.0
        %428 = vmatprep.subr.mxu0 0.0
        %429 = vmatpush1.msra.mxu0 0.0
        %430 = vmatprep.subr.mxu0 0.0
        %431 = vmatpush1.msra.mxu0 0.0
        %432 = vmatprep.subr.mxu0 0.0
        %433 = vmatpush1.msra.mxu0 0.0
        %434 = vmatprep.subr.mxu0 0.0
        %435 = vmatpush1.msra.mxu0 0.0
        %436 = vmatprep.subr.mxu0 0.0
        %437 = vmatpush1.msra.mxu0 0.0
        %438 = vmatprep.subr.mxu0 0.0
        %439 = vmatpush1.msra.mxu0 0.0
        %440 = vmatprep.subr.mxu0 0.0
        %441 = vmatpush1.msra.mxu0 0.0
        %442 = vmatprep.subr.mxu0 0.0
        %443 = vmatpush1.msra.mxu0 0.0
        %444 = vmatprep.subr.mxu0 0.0
        %445 = vmatpush1.msra.mxu0 0.0
        %446 = vmatprep.mubr.f32.mxu0 0.0
        %447 = vmatmul.mubr.f32.gmra.mrb[0].mxu0 %v223
        %v448 = vpop.f32.mrb[0].mxu0
        %v449 = vadd.f32 0.0, %v448
        %v450 = vpop.f32.mrb[0].mxu0
        %451 = vmatprep.mubr.f32.mxu0 0.0
        %452 = vmatmul.mubr.f32.gmra.mrb[0].mxu0 %v226
        %v453 = vpop.f32.mrb[0].mxu0
        %v454 = vadd.f32 0.0, %v453
        %v455 = vpop.f32.mrb[0].mxu0
        %456 = vdwg.mxu0
        %457 = vst.msk [vmem:[#allocation2 + $0x20] sm:$0xff] %vm221, %v449
        %458 = vst.msk [vmem:[#allocation2 + $0x28] sm:$0xff] %vm221, %v454
        %459 = vmatprep.subr.mxu0 0.0
        %460 = vmatpush1.msra.mxu0 %v219
        %461 = vmatprep.subr.mxu0 0.0
        %462 = vmatpush1.msra.mxu0 %v220
        %463 = vmatprep.subr.mxu0 0.0
        %464 = vmatpush1.msra.mxu0 0.0
        %465 = vmatprep.subr.mxu0 0.0
        %466 = vmatpush1.msra.mxu0 0.0
        %467 = vmatprep.subr.mxu0 0.0
        %468 = vmatpush1.msra.mxu0 0.0
        %469 = vmatprep.subr.mxu0 0.0
        %470 = vmatpush1.msra.mxu0 0.0
        %471 = vmatprep.subr.mxu0 0.0
        %472 = vmatpush1.msra.mxu0 0.0
        %473 = vmatprep.subr.mxu0 0.0
        %474 = vmatpush1.msra.mxu0 0.0
        %475 = vmatprep.subr.mxu0 0.0
        %476 = vmatpush1.msra.mxu0 0.0
        %477 = vmatprep.subr.mxu0 0.0
        %478 = vmatpush1.msra.mxu0 0.0
        %479 = vmatprep.subr.mxu0 0.0
        %480 = vmatpush1.msra.mxu0 0.0
        %481 = vmatprep.subr.mxu0 0.0
        %482 = vmatpush1.msra.mxu0 0.0
        %483 = vmatprep.subr.mxu0 0.0
        %484 = vmatpush1.msra.mxu0 0.0
        %485 = vmatprep.subr.mxu0 0.0
        %486 = vmatpush1.msra.mxu0 0.0
        %487 = vmatprep.subr.mxu0 0.0
        %488 = vmatpush1.msra.mxu0 0.0
        %489 = vmatprep.subr.mxu0 0.0
        %490 = vmatpush1.msra.mxu0 0.0
        %491 = vmatprep.subr.mxu0 0.0
        %492 = vmatpush1.msra.mxu0 0.0
        %493 = vmatprep.subr.mxu0 0.0
        %494 = vmatpush1.msra.mxu0 0.0
        %495 = vmatprep.subr.mxu0 0.0
        %496 = vmatpush1.msra.mxu0 0.0
        %497 = vmatprep.subr.mxu0 0.0
        %498 = vmatpush1.msra.mxu0 0.0
        %499 = vmatprep.subr.mxu0 0.0
        %500 = vmatpush1.msra.mxu0 0.0
        %501 = vmatprep.subr.mxu0 0.0
        %502 = vmatpush1.msra.mxu0 0.0
        %503 = vmatprep.subr.mxu0 0.0
        %504 = vmatpush1.msra.mxu0 0.0
        %505 = vmatprep.subr.mxu0 0.0
        %506 = vmatpush1.msra.mxu0 0.0
        %507 = vmatprep.subr.mxu0 0.0
        %508 = vmatpush1.msra.mxu0 0.0
        %509 = vmatprep.subr.mxu0 0.0
        %510 = vmatpush1.msra.mxu0 0.0
        %511 = vmatprep.subr.mxu0 0.0
        %512 = vmatpush1.msra.mxu0 0.0
        %513 = vmatprep.subr.mxu0 0.0
        %514 = vmatpush1.msra.mxu0 0.0
        %515 = vmatprep.subr.mxu0 0.0
        %516 = vmatpush1.msra.mxu0 0.0
        %517 = vmatprep.subr.mxu0 0.0
        %518 = vmatpush1.msra.mxu0 0.0
        %519 = vmatprep.subr.mxu0 0.0
        %520 = vmatpush1.msra.mxu0 0.0
        %521 = vmatprep.subr.mxu0 0.0
        %522 = vmatpush1.msra.mxu0 0.0
        %523 = vmatprep.mubr.f32.mxu0 0.0
        %524 = vmatmul.mubr.f32.gmra.mrb[0].mxu0 %v223
        %v525 = vpop.f32.mrb[0].mxu0
        %v526 = vadd.f32 0.0, %v525
        %v527 = vpop.f32.mrb[0].mxu0
        %528 = vmatprep.mubr.f32.mxu0 0.0
        %529 = vmatmul.mubr.f32.gmra.mrb[0].mxu0 %v226
        %v530 = vpop.f32.mrb[0].mxu0
        %v531 = vadd.f32 0.0, %v530
        %v532 = vpop.f32.mrb[0].mxu0
        %533 = vdwg.mxu0
        %534 = vst.msk [vmem:[#allocation2 + $0x30] sm:$0xff] %vm221, %v526
        %535 = vst.msk [vmem:[#allocation2 + $0x38] sm:$0xff] %vm221, %v531
        %v536 = vld [vmem:[#allocation2] sm:$0xff]
        %v537 = vld [vmem:[#allocation2 + $0x8] sm:$0xff]
        %v538 = vld [vmem:[#allocation2 + $0x10] sm:$0xff]
        %v539 = vld [vmem:[#allocation2 + $0x18] sm:$0xff]
        %v540 = vld [vmem:[#allocation2 + $0x20] sm:$0xff]
        %v541 = vld [vmem:[#allocation2 + $0x28] sm:$0xff]
        %v542 = vld [vmem:[#allocation2 + $0x30] sm:$0xff]
        %v543 = vld [vmem:[#allocation2 + $0x38] sm:$0xff]
        %v545 = vsel %vm221, %v536, 0
        %v548 = vsel %vm221, %v537, 0
        %v551 = vsel %vm221, %v538, 0
        %v554 = vsel %vm221, %v539, 0
        %v557 = vsel %vm221, %v540, 0
        %v560 = vsel %vm221, %v541, 0
        %v563 = vsel %vm221, %v542, 0
        %v566 = vsel %vm221, %v543, 0
        %568 = vmatprep.subr.mxu0 0.0
        %569 = vmatpush1.msra.mxu0 %v211
        %570 = vmatprep.subr.mxu0 0.0
        %571 = vmatpush1.msra.mxu0 %v212
        %572 = vmatprep.subr.mxu0 0.0
        %573 = vmatpush1.msra.mxu0 0.0
        %574 = vmatprep.subr.mxu0 0.0
        %575 = vmatpush1.msra.mxu0 0.0
        %576 = vmatprep.subr.mxu0 0.0
        %577 = vmatpush1.msra.mxu0 0.0
        %578 = vmatprep.subr.mxu0 0.0
        %579 = vmatpush1.msra.mxu0 0.0
        %580 = vmatprep.subr.mxu0 0.0
        %581 = vmatpush1.msra.mxu0 0.0
        %582 = vmatprep.subr.mxu0 0.0
        %583 = vmatpush1.msra.mxu0 0.0
        %584 = vmatprep.subr.mxu0 0.0
        %585 = vmatpush1.msra.mxu0 0.0
        %586 = vmatprep.subr.mxu0 0.0
        %587 = vmatpush1.msra.mxu0 0.0
        %588 = vmatprep.subr.mxu0 0.0
        %589 = vmatpush1.msra.mxu0 0.0
        %590 = vmatprep.subr.mxu0 0.0
        %591 = vmatpush1.msra.mxu0 0.0
        %592 = vmatprep.subr.mxu0 0.0
        %593 = vmatpush1.msra.mxu0 0.0
        %594 = vmatprep.subr.mxu0 0.0
        %595 = vmatpush1.msra.mxu0 0.0
        %596 = vmatprep.subr.mxu0 0.0
        %597 = vmatpush1.msra.mxu0 0.0
        %598 = vmatprep.subr.mxu0 0.0
        %599 = vmatpush1.msra.mxu0 0.0
        %600 = vmatprep.subr.mxu0 0.0
        %601 = vmatpush1.msra.mxu0 0.0
        %602 = vmatprep.subr.mxu0 0.0
        %603 = vmatpush1.msra.mxu0 0.0
        %604 = vmatprep.subr.mxu0 0.0
        %605 = vmatpush1.msra.mxu0 0.0
        %606 = vmatprep.subr.mxu0 0.0
        %607 = vmatpush1.msra.mxu0 0.0
        %608 = vmatprep.subr.mxu0 0.0
        %609 = vmatpush1.msra.mxu0 0.0
        %610 = vmatprep.subr.mxu0 0.0
        %611 = vmatpush1.msra.mxu0 0.0
        %612 = vmatprep.subr.mxu0 0.0
        %613 = vmatpush1.msra.mxu0 0.0
        %614 = vmatprep.subr.mxu0 0.0
        %615 = vmatpush1.msra.mxu0 0.0
        %616 = vmatprep.subr.mxu0 0.0
        %617 = vmatpush1.msra.mxu0 0.0
        %618 = vmatprep.subr.mxu0 0.0
        %619 = vmatpush1.msra.mxu0 0.0
        %620 = vmatprep.subr.mxu0 0.0
        %621 = vmatpush1.msra.mxu0 0.0
        %622 = vmatprep.subr.mxu0 0.0
        %623 = vmatpush1.msra.mxu0 0.0
        %624 = vmatprep.subr.mxu0 0.0
        %625 = vmatpush1.msra.mxu0 0.0
        %626 = vmatprep.subr.mxu0 0.0
        %627 = vmatpush1.msra.mxu0 0.0
        %628 = vmatprep.subr.mxu0 0.0
        %629 = vmatpush1.msra.mxu0 0.0
        %630 = vmatprep.subr.mxu0 0.0
        %631 = vmatpush1.msra.mxu0 0.0
        %632 = vmatprep.mubr.f32.mxu0 0.0
        %633 = vmatmul.mubr.f32.gmra.mrb[0].mxu0 %v545
        %v634 = vpop.f32.mrb[0].mxu0
        %v635 = vadd.f32 0.0, %v634
        %v636 = vpop.f32.mrb[0].mxu0
        %637 = vmatprep.mubr.f32.mxu0 0.0
        %638 = vmatmul.mubr.f32.gmra.mrb[0].mxu0 %v548
        %v639 = vpop.f32.mrb[0].mxu0
        %v640 = vadd.f32 0.0, %v639
        %v641 = vpop.f32.mrb[0].mxu0
        %642 = vmatprep.mubr.f32.mxu0 0.0
        %643 = vmatmul.mubr.f32.gmra.mrb[0].mxu0 %v551
        %v644 = vpop.f32.mrb[0].mxu0
        %v645 = vadd.f32 0.0, %v644
        %v646 = vpop.f32.mrb[0].mxu0
        %647 = vmatprep.mubr.f32.mxu0 0.0
        %648 = vmatmul.mubr.f32.gmra.mrb[0].mxu0 %v554
        %v649 = vpop.f32.mrb[0].mxu0
        %v650 = vadd.f32 0.0, %v649
        %v651 = vpop.f32.mrb[0].mxu0
        %652 = vmatprep.mubr.f32.mxu0 0.0
        %653 = vmatmul.mubr.f32.gmra.mrb[0].mxu0 %v557
        %v654 = vpop.f32.mrb[0].mxu0
        %v655 = vadd.f32 0.0, %v654
        %v656 = vpop.f32.mrb[0].mxu0
        %657 = vmatprep.mubr.f32.mxu0 0.0
        %658 = vmatmul.mubr.f32.gmra.mrb[0].mxu0 %v560
        %v659 = vpop.f32.mrb[0].mxu0
        %v660 = vadd.f32 0.0, %v659
        %v661 = vpop.f32.mrb[0].mxu0
        %662 = vmatprep.mubr.f32.mxu0 0.0
        %663 = vmatmul.mubr.f32.gmra.mrb[0].mxu0 %v563
        %v664 = vpop.f32.mrb[0].mxu0
        %v665 = vadd.f32 0.0, %v664
        %v666 = vpop.f32.mrb[0].mxu0
        %667 = vmatprep.mubr.f32.mxu0 0.0
        %668 = vmatmul.mubr.f32.gmra.mrb[0].mxu0 %v566
        %v669 = vpop.f32.mrb[0].mxu0
        %v670 = vadd.f32 0.0, %v669
        %v671 = vpop.f32.mrb[0].mxu0
        %672 = vdwg.mxu0
        %673 = vst.msk [vmem:[%s193] sm:$0xff] %vm221, %v635
        %674 = vst.msk [vmem:[%s193 + $0x8] sm:$0xff] %vm221, %v640
        %675 = vst.msk [vmem:[%s193 + $0x10] sm:$0xff] %vm221, %v645
        %676 = vst.msk [vmem:[%s193 + $0x18] sm:$0xff] %vm221, %v650
        %677 = vst.msk [vmem:[%s193 + $0x20] sm:$0xff] %vm221, %v655
        %678 = vst.msk [vmem:[%s193 + $0x28] sm:$0xff] %vm221, %v660
        %679 = vst.msk [vmem:[%s193 + $0x30] sm:$0xff] %vm221, %v665
        %680 = vst.msk [vmem:[%s193 + $0x38] sm:$0xff] %vm221, %v670
        %s681 = sand.u32 %s103, 1
        %s682 = scalar_lea.sflag [#allocation4], %s681
        %s683 = sand.u32 %s103, 1
        %s684 = smul.addr %s683, 64
        %s685 = scalar_lea.vmem [#allocation3], %s684
        // Predicated region
        $region33: #{random_shifts_aug.1} parent=31 // pred_check
          %p686 = pneg %p113
        $region34: #{random_shifts_aug.1} parent=31 // pred_check_branch
          %688 = sbr.rel (%p686) target = $region36
        $region35: #{random_shifts_aug.1} parent=31 // pred_region
          %s690 = ssub.s32 1024, 1024
          %691 = vsyncadd %s682, %s690
          %s692 = smul.addr %s17, 8
          %s693 = smul.addr %s692, 128
          %s694 = scalar_lea.hbm %s3, %s693
          %s695 = sshll.u32 %s685, 4
          %s696 = int_to_ptr.vmem [resolvable:$true] %s695
          %701 = dma.vmem_to_hbm [thread:$0]  %s696, 1024, %s694, %s682, 128, 128, 8
        $region36: #{random_shifts_aug.1} parent=31 // pred_fallthru
          _
      $region32: #{random_shifts_aug.1} parent=5 // pred_fallthru
        _
      %p702 = scmp.le.s32.totalorder 2, %s12
      // Predicated region
      $region37: #{random_shifts_aug.1} parent=5 // pred_check
        %p703 = pneg %p702
      $region38: #{random_shifts_aug.1} parent=5 // pred_check_branch
        %705 = sbr.rel (%p703) target = $region40
      $region39: #{random_shifts_aug.1} parent=5 // pred_region
        %s706 = ssub.s32 %s12, 2
        // Predicated region
        $region41: #{random_shifts_aug.1} parent=39 // pred_check
          %p707 = pneg %p119
        $region42: #{random_shifts_aug.1} parent=39 // pred_check_branch
          %709 = sbr.rel (%p707) target = $region44
        $region43: #{random_shifts_aug.1} parent=39 // pred_region
          %s710 = sand.u32 %s104, 1
          %s711 = scalar_lea.sflag [#allocation4], %s710
          %s712 = sand.u32 %s104, 1
          %s713 = smul.addr %s712, 64
          %s714 = scalar_lea.vmem [#allocation3], %s713
          %715 = dma.done %s711, 1024
        $region44: #{random_shifts_aug.1} parent=39 // pred_fallthru
          _
      $region40: #{random_shifts_aug.1} parent=5 // pred_fallthru
        _
    $region6: #{random_shifts_aug.1} parent=1 // loop_footer
      %s16 = sadd.s32 1, %s12
    $region7: #{random_shifts_aug.1} parent=1 // loop_footer_branch
      %11 = sbr.rel target = $region3
    $region8: #{random_shifts_aug.1} parent=1 // loop_exit
      _
    %716 = vsyncpa [#allocation4], 1
    %s717 = scalar_lea.sflag [#allocation4], 1
    %718 = vsyncpa %s717, 1

</llo_original>
